<compile_context>
chip_gen: v7x
topology: tpu7x:2x2x1
jax: 0.10.0
libtpu: 0.0.40
codegen_flags: <defaults>
</compile_context>

<pallas_src>
import functools

import jax
import jax.numpy as jnp
from jax.experimental import pallas as pl
from jax.experimental.pallas import tpu as pltpu


def _round_up(n, m):
    return ((n + m - 1) // m) * m


# ------------------------------- kernel -------------------------------------

def mlp_kernel(x_ref, w1_ref, b1_ref, w2_ref, b2_ref, w3_ref, b3_ref, o_ref):
    """One batch-tile of the fused 3-layer MLP.

    x:  (TB, D_in)  f32  (cast to bf16 in VMEM, no extra HBM pass)
    w1: (D_in, 64) bf16   b1: (1, 64) f32
    w2: (64, 32)   bf16   b2: (1, 32) f32
    w3: (32, D_out) bf16  b3: (1, D_out) f32
    o:  (TB, D_out) bf16
    """
    # In-VMEM VPU cast of the tile to bf16 for the MXU (per review: no
    # wrapper-side astype, which would add a full extra HBM round trip).
    x = x_ref[...].astype(w1_ref.dtype)

    # --- net1: Linear (BN folded into w1/b1) -> ReLU ; Dropout = identity ---
    h1 = jnp.dot(x, w1_ref[...], preferred_element_type=jnp.float32) + b1_ref[...]
    h1 = jnp.maximum(h1, 0.0)

    # --- net2: Linear (BN folded into w2/b2) -> ReLU ; Dropout = identity ---
    h2 = jnp.dot(h1.astype(w2_ref.dtype), w2_ref[...],
                 preferred_element_type=jnp.float32) + b2_ref[...]
    h2 = jnp.maximum(h2, 0.0)

    # --- net3: Linear ---
    o = jnp.dot(h2.astype(w3_ref.dtype), w3_ref[...],
                preferred_element_type=jnp.float32) + b3_ref[...]
    # d_out < 128 -> masked stores; acceptable (output bytes are tiny, and
    # bf16 halves them vs the previous f32 output).
    o_ref[...] = o.astype(o_ref.dtype)


# ------------------------------- wrapper -------------------------------------

def _pick_batch_tiling(batch, tb_max):
    """Pick (tile_rows, n_steps, padded_batch) with bounded pad waste.

    - tile rows are a multiple of 16 (safe sublane alignment for f32 input
      tiles and bf16 output tiles),
    - pad waste per step is < 16 rows (no round_up(B, tb) blow-up),
    - >= 2 grid steps whenever the batch is large enough, so the "parallel"
      batch axis shards across both TensorCores on v7x.
    """
    align = 16
    b_min = _round_up(max(batch, 1), align)
    min_steps = 2 if b_min >= 2 * align else 1
    n_steps = max(pl.cdiv(b_min, tb_max), min_steps)
    tb = _round_up(pl.cdiv(b_min, n_steps), align)
    b_pad = n_steps * tb
    return tb, n_steps, b_pad


@functools.partial(jax.jit, static_argnames=("tb_max", "out_dtype"))
def net_forward(x, params, *, tb_max=4096, out_dtype=jnp.bfloat16):
    """Eval-mode forward of `Net`. `params` are BN-folded (w1,b1,w2,b2,w3,b3)."""
    w1, b1, w2, b2, w3, b3 = params
    B, d_in = x.shape
    h1 = w1.shape[1]
    h2 = w2.shape[1]
    d_out = w3.shape[1]

    tb, n_steps, b_pad = _pick_batch_tiling(B, tb_max)
    if b_pad != B:
        x = jnp.pad(x, ((0, b_pad - B), (0, 0)))
    grid = (n_steps,)

    # Weights in bf16 (tiny, one-time cast); biases f32, reshaped to (1, F) so
    # raw 1-D state_dict-style biases also work.
    wdt = jnp.bfloat16
    w1_c, w2_c, w3_c = (w.astype(wdt) for w in (w1, w2, w3))
    b1_c, b2_c, b3_c = (jnp.asarray(b, jnp.float32).reshape(1, -1)
                        for b in (b1, b2, b3))

    # x / out tiles move with the grid index; weights & biases are pinned to
    # block (0,0) so they stay VMEM-resident across all steps.
    x_spec = pl.BlockSpec((tb, d_in), lambda i: (i, 0))
    o_spec = pl.BlockSpec((tb, d_out), lambda i: (i, 0))

    def const_spec(shape):
        return pl.BlockSpec(shape, lambda i: (0, 0))

    in_specs = [
        x_spec,
        const_spec((d_in, h1)), const_spec((1, h1)),
        const_spec((h1, h2)), const_spec((1, h2)),
        const_spec((h2, d_out)), const_spec((1, d_out)),
    ]

    # Honest scheduling hint: f32 x in, bf16 out, bf16 weights, f32 biases,
    # padded row count.
    flops = 2 * b_pad * (d_in * h1 + h1 * h2 + h2 * d_out)
    out_itemsize = jnp.dtype(out_dtype).itemsize
    bytes_accessed = (
        b_pad * d_in * x.dtype.itemsize
        + b_pad * d_out * out_itemsize
        + sum(int(w.size) * 2 for w in (w1_c, w2_c, w3_c))
        + sum(int(b.size) * 4 for b in (b1_c, b2_c, b3_c))
    )
    cost = pl.CostEstimate(flops=flops, transcendentals=0,
                           bytes_accessed=bytes_accessed)

    out = pl.pallas_call(
        mlp_kernel,
        out_shape=jax.ShapeDtypeStruct((b_pad, d_out), out_dtype),
        grid_spec=pltpu.PrefetchScalarGridSpec(
            num_scalar_prefetch=0,
            grid=grid,
            in_specs=in_specs,
            out_specs=o_spec,
        ),
        compiler_params=pltpu.CompilerParams(
            dimension_semantics=("parallel",),  # shard batch tiles across TCs (v7x)
        ),
        cost_estimate=cost,
    )(x, w1_c, b1_c, w2_c, b2_c, w3_c, b3_c)

    if b_pad != B:
        out = out[:B]
    return out


# ----------------------------- parameter prep -------------------------------

def init_linear(key, fan_in, fan_out):
    """Deterministic PyTorch-style init: U(-1/sqrt(fan_in), 1/sqrt(fan_in))."""
    kw, kb = jax.random.split(key)
    bound = 1.0 / jnp.sqrt(jnp.float32(fan_in))
    w = jax.random.uniform(kw, (fan_in, fan_out), jnp.float32, -bound, bound)
    b = jax.random.uniform(kb, (1, fan_out), jnp.float32, -bound, bound)
    return w, b


def init_bn(dim):
    """BatchNorm1d at init: gamma=1, beta=0, running mean=0, running var=1."""
    return (jnp.ones((1, dim), jnp.float32), jnp.zeros((1, dim), jnp.float32),
            jnp.zeros((1, dim), jnp.float32), jnp.ones((1, dim), jnp.float32))


def fold_bn_into_linear(w, b, gamma, beta, mean, var, eps=1e-5):
    """Fold eval-mode BN(y) = (y-mean)*gamma/sqrt(var+eps) + beta into Linear."""
    scale = gamma / jnp.sqrt(var + eps)        # (1, F)
    w_f = w * scale                            # broadcast over input rows
    b_f = (b - mean) * scale + beta
    return w_f, b_f


def ref_forward(x, params):
    """Pure-JAX f32 reference (eval mode, BN already folded)."""
    w1, b1, w2, b2, w3, b3 = params
    h1 = jnp.maximum(x @ w1 + b1, 0.0)
    h2 = jnp.maximum(h1 @ w2 + b2, 0.0)
    return h2 @ w3 + b3


if __name__ == "__main__":
    # Small shapes consistent with the module: batch=8, input_dim=32, output_dim=10
    B, D_IN, D_OUT = 8, 32, 10
    H1, H2 = 64, 32

    key = jax.random.PRNGKey(0)
    kx, k1, k2, k3 = jax.random.split(key, 4)

    x = jax.random.normal(kx, (B, D_IN), jnp.float32)

    w1, b1 = init_linear(k1, D_IN, H1)
    g1, be1, m1, v1 = init_bn(H1)
    w2, b2 = init_linear(k2, H1, H2)
    g2, be2, m2, v2 = init_bn(H2)
    w3, b3 = init_linear(k3, H2, D_OUT)

    # One-time BN fold (wrapper-side algebra, no kernel work).
    w1f, b1f = fold_bn_into_linear(w1, b1, g1, be1, m1, v1)
    w2f, b2f = fold_bn_into_linear(w2, b2, g2, be2, m2, v2)

    params = (w1f, b1f, w2f, b2f, w3, b3)

    out = net_forward(x, params)
    jax.block_until_ready(out)
    assert out.shape == (B, D_OUT), out.shape
    assert bool(jnp.all(jnp.isfinite(out)))

    # bf16 compute/output tolerance is ~1e-2 relative; check against f32 ref
    # with a generous bound.
    ref = ref_forward(x, params)
    max_err = float(jnp.max(jnp.abs(out.astype(jnp.float32) - ref)))
    assert max_err < 0.25, max_err
    print("KERNEL_OK")
</pallas_src>

<mosaic_0001>
module attributes {stable_mosaic.version = 11 : i64} {
  func.func @mlp_kernel(%arg0: i32, %arg1: memref<16x32xf32, #tpu.memory_space<vmem>>, %arg2: memref<32x64xbf16, #tpu.memory_space<vmem>>, %arg3: memref<1x64xf32, #tpu.memory_space<vmem>>, %arg4: memref<64x32xbf16, #tpu.memory_space<vmem>>, %arg5: memref<1x32xf32, #tpu.memory_space<vmem>>, %arg6: memref<32x10xbf16, #tpu.memory_space<vmem>>, %arg7: memref<1x10xf32, #tpu.memory_space<vmem>>, %arg8: memref<16x10xbf16, #tpu.memory_space<vmem>>) attributes {dimension_semantics = [#tpu.dimension_semantics<parallel>], iteration_bounds = array<i64: 1>, scalar_prefetch = 0 : i64, scratch_operands = 0 : i64, tpu.core_type = #tpu.core_type<tc>, window_params = [{transform_indices = @transform_0, window_bounds = array<i64: 16, 32>}, {pipeline_mode = #tpu.pipeline_mode<synchronous>, transform_indices = @transform_1, window_bounds = array<i64: 32, 64>}, {pipeline_mode = #tpu.pipeline_mode<synchronous>, transform_indices = @transform_2, window_bounds = array<i64: 1, 64>}, {pipeline_mode = #tpu.pipeline_mode<synchronous>, transform_indices = @transform_3, window_bounds = array<i64: 64, 32>}, {pipeline_mode = #tpu.pipeline_mode<synchronous>, transform_indices = @transform_4, window_bounds = array<i64: 1, 32>}, {pipeline_mode = #tpu.pipeline_mode<synchronous>, transform_indices = @transform_5, window_bounds = array<i64: 32, 10>}, {pipeline_mode = #tpu.pipeline_mode<synchronous>, transform_indices = @transform_6, window_bounds = array<i64: 1, 10>}, {transform_indices = @transform_7, window_bounds = array<i64: 16, 10>}]} {
    %c0 = arith.constant 0 : index
    %c0_0 = arith.constant 0 : index
    %0 = vector.load %arg1[%c0, %c0_0] : memref<16x32xf32, #tpu.memory_space<vmem>>, vector<16x32xf32>
    %1 = arith.truncf %0 : vector<16x32xf32> to vector<16x32xbf16>
    %c0_1 = arith.constant 0 : index
    %c0_2 = arith.constant 0 : index
    %2 = vector.load %arg2[%c0_1, %c0_2] : memref<32x64xbf16, #tpu.memory_space<vmem>>, vector<32x64xbf16>
    %cst = arith.constant dense<0.000000e+00> : vector<16x64xf32>
    %3 = tpu.matmul %1, %2, %cst {dimension_numbers = #tpu.dot_dimension_numbers<[1], [0], [0], [1], [0, 0, 1, 1], [], []>} : vector<16x32xbf16>, vector<32x64xbf16>, vector<16x64xf32> -> vector<16x64xf32>
    %c0_3 = arith.constant 0 : index
    %c0_4 = arith.constant 0 : index
    %4 = vector.load %arg3[%c0_3, %c0_4] : memref<1x64xf32, #tpu.memory_space<vmem>>, vector<1x64xf32>
    %5 = vector.broadcast %4 : vector<1x64xf32> to vector<16x64xf32>
    %6 = arith.addf %3, %5 : vector<16x64xf32>
    %cst_5 = arith.constant 0.000000e+00 : f32
    %7 = vector.broadcast %cst_5 : f32 to vector<16x64xf32>
    %8 = arith.maximumf %6, %7 : vector<16x64xf32>
    %9 = arith.truncf %8 : vector<16x64xf32> to vector<16x64xbf16>
    %c0_6 = arith.constant 0 : index
    %c0_7 = arith.constant 0 : index
    %10 = vector.load %arg4[%c0_6, %c0_7] : memref<64x32xbf16, #tpu.memory_space<vmem>>, vector<64x32xbf16>
    %cst_8 = arith.constant dense<0.000000e+00> : vector<16x32xf32>
    %11 = tpu.matmul %9, %10, %cst_8 {dimension_numbers = #tpu.dot_dimension_numbers<[1], [0], [0], [1], [0, 0, 1, 1], [], []>} : vector<16x64xbf16>, vector<64x32xbf16>, vector<16x32xf32> -> vector<16x32xf32>
    %c0_9 = arith.constant 0 : index
    %c0_10 = arith.constant 0 : index
    %12 = vector.load %arg5[%c0_9, %c0_10] : memref<1x32xf32, #tpu.memory_space<vmem>>, vector<1x32xf32>
    %13 = vector.broadcast %12 : vector<1x32xf32> to vector<16x32xf32>
    %14 = arith.addf %11, %13 : vector<16x32xf32>
    %cst_11 = arith.constant 0.000000e+00 : f32
    %15 = vector.broadcast %cst_11 : f32 to vector<16x32xf32>
    %16 = arith.maximumf %14, %15 : vector<16x32xf32>
    %17 = arith.truncf %16 : vector<16x32xf32> to vector<16x32xbf16>
    %c0_12 = arith.constant 0 : index
    %c0_13 = arith.constant 0 : index
    %18 = vector.load %arg6[%c0_12, %c0_13] : memref<32x10xbf16, #tpu.memory_space<vmem>>, vector<32x10xbf16>
    %cst_14 = arith.constant dense<0.000000e+00> : vector<16x10xf32>
    %19 = tpu.matmul %17, %18, %cst_14 {dimension_numbers = #tpu.dot_dimension_numbers<[1], [0], [0], [1], [0, 0, 1, 1], [], []>} : vector<16x32xbf16>, vector<32x10xbf16>, vector<16x10xf32> -> vector<16x10xf32>
    %c0_15 = arith.constant 0 : index
    %c0_16 = arith.constant 0 : index
    %20 = vector.load %arg7[%c0_15, %c0_16] : memref<1x10xf32, #tpu.memory_space<vmem>>, vector<1x10xf32>
    %21 = vector.broadcast %20 : vector<1x10xf32> to vector<16x10xf32>
    %22 = arith.addf %19, %21 : vector<16x10xf32>
    %23 = arith.truncf %22 : vector<16x10xf32> to vector<16x10xbf16>
    %c0_17 = arith.constant 0 : index
    %c0_18 = arith.constant 0 : index
    %24 = vector.load %arg8[%c0_17, %c0_18] : memref<16x10xbf16, #tpu.memory_space<vmem>>, vector<16x10xbf16>
    tpu.vector_store %arg8[%c0_17, %c0_18], %23 {strides = array<i32>} : memref<16x10xbf16, #tpu.memory_space<vmem>>, vector<16x10xbf16>,
    return
  }
  func.func @transform_0(%arg0: i32) -> (i32, i32) {
    %c0_i32 = arith.constant 0 : i32
    %c0_i32_0 = arith.constant 0 : i32
    return %arg0, %c0_i32 : i32, i32
  }
  func.func @transform_1(%arg0: i32) -> (i32, i32) {
    %c0_i32 = arith.constant 0 : i32
    %c0_i32_0 = arith.constant 0 : i32
    %c0_i32_1 = arith.constant 0 : i32
    return %c0_i32, %c0_i32_0 : i32, i32
  }
  func.func @transform_2(%arg0: i32) -> (i32, i32) {
    %c0_i32 = arith.constant 0 : i32
    %c0_i32_0 = arith.constant 0 : i32
    %c0_i32_1 = arith.constant 0 : i32
    return %c0_i32, %c0_i32_0 : i32, i32
  }
  func.func @transform_3(%arg0: i32) -> (i32, i32) {
    %c0_i32 = arith.constant 0 : i32
    %c0_i32_0 = arith.constant 0 : i32
    %c0_i32_1 = arith.constant 0 : i32
    return %c0_i32, %c0_i32_0 : i32, i32
  }
  func.func @transform_4(%arg0: i32) -> (i32, i32) {
    %c0_i32 = arith.constant 0 : i32
    %c0_i32_0 = arith.constant 0 : i32
    %c0_i32_1 = arith.constant 0 : i32
    return %c0_i32, %c0_i32_0 : i32, i32
  }
  func.func @transform_5(%arg0: i32) -> (i32, i32) {
    %c0_i32 = arith.constant 0 : i32
    %c0_i32_0 = arith.constant 0 : i32
    %c0_i32_1 = arith.constant 0 : i32
    return %c0_i32, %c0_i32_0 : i32, i32
  }
  func.func @transform_6(%arg0: i32) -> (i32, i32) {
    %c0_i32 = arith.constant 0 : i32
    %c0_i32_0 = arith.constant 0 : i32
    %c0_i32_1 = arith.constant 0 : i32
    return %c0_i32, %c0_i32_0 : i32, i32
  }
  func.func @transform_7(%arg0: i32) -> (i32, i32) {
    %c0_i32 = arith.constant 0 : i32
    %c0_i32_0 = arith.constant 0 : i32
    return %arg0, %c0_i32 : i32, i32
  }
}

</mosaic_0001>

<llo_original>
// kernel: net_forward.1
$region0: #{net_forward.1}
  #allocation0 [shape = 'u32[]', space=smem, size = 0x4, offset = 0x4, fixed_abs, tag = 'smem constant byte address 0x4 - core index']
  #allocation1 [shape = 'u32[144,128]{1,0:T(1,128)}', space=vmem, size = 0x12000, scoped, tag = 'internal scratch']
  %s0 = inlined_call_operand.vmem [shape: f32[16,32], index: 0, kind: input, shape index: {}]
  %s1 = inlined_call_operand.vmem [shape: bf16[32,64], index: 1, kind: input, shape index: {}]
  %s2 = inlined_call_operand.vmem [shape: f32[1,64], index: 2, kind: input, shape index: {}]
  %s3 = inlined_call_operand.vmem [shape: bf16[64,32], index: 3, kind: input, shape index: {}]
  %s4 = inlined_call_operand.vmem [shape: f32[1,32], index: 4, kind: input, shape index: {}]
  %s5 = inlined_call_operand.vmem [shape: bf16[32,10], index: 5, kind: input, shape index: {}]
  %s6 = inlined_call_operand.vmem [shape: f32[1,10], index: 6, kind: input, shape index: {}]
  %s7 = inlined_call_operand.vmem [shape: bf16[16,10], index: 7, kind: output, shape index: {}]
  %s8 = sld [smem:[#allocation0]]
  $region38: #{net_forward.1} parent=0
    _
  %s10 = ssub.s32 1, %s8
  %s11 = scalar_select 0, %s10, %s8
  // Predicated region
  $region2: #{net_forward.1} parent=0 // pred_check
    _
  $region3: #{net_forward.1} parent=0 // pred_check_branch
    %13 = sbr.rel (0) target = $region5
  $region4: #{net_forward.1} parent=0 // pred_region
    _
  $region5: #{net_forward.1} parent=0 // pred_fallthru
    _
  // Predicated region
  $region6: #{net_forward.1} parent=0 // pred_check
    _
  $region7: #{net_forward.1} parent=0 // pred_check_branch
    %15 = sbr.rel (0) target = $region9
  $region8: #{net_forward.1} parent=0 // pred_region
    _
  $region9: #{net_forward.1} parent=0 // pred_fallthru
    _
  // Predicated region
  $region10: #{net_forward.1} parent=0 // pred_check
    _
  $region11: #{net_forward.1} parent=0 // pred_check_branch
    %17 = sbr.rel (0) target = $region13
  $region12: #{net_forward.1} parent=0 // pred_region
    _
  $region13: #{net_forward.1} parent=0 // pred_fallthru
    _
  // Predicated region
  $region14: #{net_forward.1} parent=0 // pred_check
    _
  $region15: #{net_forward.1} parent=0 // pred_check_branch
    %19 = sbr.rel (0) target = $region17
  $region16: #{net_forward.1} parent=0 // pred_region
    _
  $region17: #{net_forward.1} parent=0 // pred_fallthru
    _
  // Predicated region
  $region18: #{net_forward.1} parent=0 // pred_check
    _
  $region19: #{net_forward.1} parent=0 // pred_check_branch
    %21 = sbr.rel (0) target = $region21
  $region20: #{net_forward.1} parent=0 // pred_region
    _
  $region21: #{net_forward.1} parent=0 // pred_fallthru
    _
  // Predicated region
  $region22: #{net_forward.1} parent=0 // pred_check
    _
  $region23: #{net_forward.1} parent=0 // pred_check_branch
    %23 = sbr.rel (0) target = $region25
  $region24: #{net_forward.1} parent=0 // pred_region
    _
  $region25: #{net_forward.1} parent=0 // pred_fallthru
    _
  // Predicated region
  $region26: #{net_forward.1} parent=0 // pred_check
    _
  $region27: #{net_forward.1} parent=0 // pred_check_branch
    %25 = sbr.rel (0) target = $region29
  $region28: #{net_forward.1} parent=0 // pred_region
    _
  $region29: #{net_forward.1} parent=0 // pred_fallthru
    _
  %v27 = vld [vmem:[%s0] sm:$0xff]
  %v28 = vld [vmem:[%s0 + $0x8] sm:$0xff]
  %v29 = vpack.c.bf16 %v28, %v27
  %v30 = vld [vmem:[%s1] sm:$0xf]
  %v31 = vld [vmem:[%s1 + $0x4] sm:$0xf]
  %v32 = vld [vmem:[%s1 + $0x8] sm:$0xf]
  %v33 = vld [vmem:[%s1 + $0xc] sm:$0xf]
  %v34 = vld [vmem:[%s2] sm:$0x1]
  %v36 = vlaneseq
  %v37 = vshrl.u32 %v36, 7
  %v38 = vsub.s32 0, %v37
  %v39 = vrot.slane %v34, %v38
  %v45 = vunpack.c.l.b16 %v30
  %v46 = vunpack.c.l.b16 %v31
  %v47 = vunpack.c.l.b16 %v32
  %v48 = vunpack.c.l.b16 %v33
  %v49 = vpack.c.b16 %v46, %v45
  %v50 = vpack.c.b16 %v48, %v47
  %vm53 = vcmask 261120
  %v55 = vsel %vm53, %v29, 0
  %57 = vmatprep.subr.bf16.mxu0 0
  %58 = vmatpush1.bf16.msra.mxu0 %v49
  %59 = vmatprep.subr.bf16.mxu0 0
  %60 = vmatpush1.bf16.msra.mxu0 %v50
  %61 = vmatprep.subr.bf16.mxu0 0
  %62 = vmatpush1.bf16.msra.mxu0 0
  %63 = vmatprep.subr.bf16.mxu0 0
  %64 = vmatpush1.bf16.msra.mxu0 0
  %65 = vmatprep.subr.bf16.mxu0 0
  %66 = vmatpush1.bf16.msra.mxu0 0
  %67 = vmatprep.subr.bf16.mxu0 0
  %68 = vmatpush1.bf16.msra.mxu0 0
  %69 = vmatprep.subr.bf16.mxu0 0
  %70 = vmatpush1.bf16.msra.mxu0 0
  %71 = vmatprep.subr.bf16.mxu0 0
  %72 = vmatpush1.bf16.msra.mxu0 0
  %73 = vmatprep.subr.bf16.mxu0 0
  %74 = vmatpush1.bf16.msra.mxu0 0
  %75 = vmatprep.subr.bf16.mxu0 0
  %76 = vmatpush1.bf16.msra.mxu0 0
  %77 = vmatprep.subr.bf16.mxu0 0
  %78 = vmatpush1.bf16.msra.mxu0 0
  %79 = vmatprep.subr.bf16.mxu0 0
  %80 = vmatpush1.bf16.msra.mxu0 0
  %81 = vmatprep.subr.bf16.mxu0 0
  %82 = vmatpush1.bf16.msra.mxu0 0
  %83 = vmatprep.subr.bf16.mxu0 0
  %84 = vmatpush1.bf16.msra.mxu0 0
  %85 = vmatprep.subr.bf16.mxu0 0
  %86 = vmatpush1.bf16.msra.mxu0 0
  %87 = vmatprep.subr.bf16.mxu0 0
  %88 = vmatpush1.bf16.msra.mxu0 0
  %89 = vmatprep.mubr.bf16.mxu0 0
  %90 = vmatmul.mubr.bf16.gmra.mrb[0].mxu0 %v55
  %v91 = vpop.f32.mrb[0].mxu0
  %v92 = vadd.f32 %v39, %v91
  %v93 = vpop.f32.mrb[0].mxu0
  %v94 = vpop.f32.mrb[0].mxu0
  %v95 = vadd.f32 %v39, %v94
  %v96 = vpop.f32.mrb[0].mxu0
  %97 = vdwg.mxu0
  %v98 = vmax.f32 %v92, 0.0
  %v99 = vmax.f32 %v95, 0.0
  %v100 = vpack.c.bf16 %v99, %v98
  %v101 = vld [vmem:[%s3] sm:$0xf]
  %v102 = vld [vmem:[%s3 + $0x4] sm:$0xf]
  %v103 = vld [vmem:[%s3 + $0x8] sm:$0xf]
  %v104 = vld [vmem:[%s3 + $0xc] sm:$0xf]
  %v105 = vld [vmem:[%s3 + $0x10] sm:$0xf]
  %v106 = vld [vmem:[%s3 + $0x14] sm:$0xf]
  %v107 = vld [vmem:[%s3 + $0x18] sm:$0xf]
  %v108 = vld [vmem:[%s3 + $0x1c] sm:$0xf]
  %v109 = vld [vmem:[%s4] sm:$0x1]
  %v111 = vlaneseq
  %v112 = vshrl.u32 %v111, 7
  %v113 = vsub.s32 0, %v112
  %v114 = vrot.slane %v109, %v113
  %v124 = vunpack.c.l.b16 %v101
  %v125 = vunpack.c.l.b16 %v102
  %v126 = vunpack.c.l.b16 %v103
  %v127 = vunpack.c.l.b16 %v104
  %v128 = vunpack.c.l.b16 %v105
  %v129 = vunpack.c.l.b16 %v106
  %v130 = vunpack.c.l.b16 %v107
  %v131 = vunpack.c.l.b16 %v108
  %v132 = vpack.c.b16 %v125, %v124
  %v133 = vpack.c.b16 %v127, %v126
  %v134 = vpack.c.b16 %v129, %v128
  %v135 = vpack.c.b16 %v131, %v130
  %vm140 = vcmask 523264
  %v142 = vsel %vm140, %v100, 0
  %144 = vmatprep.subr.bf16.mxu0 0
  %145 = vmatpush1.bf16.msra.mxu0 %v132
  %146 = vmatprep.subr.bf16.mxu0 0
  %147 = vmatpush1.bf16.msra.mxu0 %v133
  %148 = vmatprep.subr.bf16.mxu0 0
  %149 = vmatpush1.bf16.msra.mxu0 %v134
  %150 = vmatprep.subr.bf16.mxu0 0
  %151 = vmatpush1.bf16.msra.mxu0 %v135
  %152 = vmatprep.subr.bf16.mxu0 0
  %153 = vmatpush1.bf16.msra.mxu0 0
  %154 = vmatprep.subr.bf16.mxu0 0
  %155 = vmatpush1.bf16.msra.mxu0 0
  %156 = vmatprep.subr.bf16.mxu0 0
  %157 = vmatpush1.bf16.msra.mxu0 0
  %158 = vmatprep.subr.bf16.mxu0 0
  %159 = vmatpush1.bf16.msra.mxu0 0
  %160 = vmatprep.subr.bf16.mxu0 0
  %161 = vmatpush1.bf16.msra.mxu0 0
  %162 = vmatprep.subr.bf16.mxu0 0
  %163 = vmatpush1.bf16.msra.mxu0 0
  %164 = vmatprep.subr.bf16.mxu0 0
  %165 = vmatpush1.bf16.msra.mxu0 0
  %166 = vmatprep.subr.bf16.mxu0 0
  %167 = vmatpush1.bf16.msra.mxu0 0
  %168 = vmatprep.subr.bf16.mxu0 0
  %169 = vmatpush1.bf16.msra.mxu0 0
  %170 = vmatprep.subr.bf16.mxu0 0
  %171 = vmatpush1.bf16.msra.mxu0 0
  %172 = vmatprep.subr.bf16.mxu0 0
  %173 = vmatpush1.bf16.msra.mxu0 0
  %174 = vmatprep.subr.bf16.mxu0 0
  %175 = vmatpush1.bf16.msra.mxu0 0
  %176 = vmatprep.mubr.bf16.mxu0 0
  %177 = vmatmul.mubr.bf16.gmra.mrb[0].mxu0 %v142
  %v178 = vpop.f32.mrb[0].mxu0
  %v179 = vadd.f32 %v114, %v178
  %v180 = vpop.f32.mrb[0].mxu0
  %v181 = vpop.f32.mrb[0].mxu0
  %v182 = vadd.f32 %v114, %v181
  %v183 = vpop.f32.mrb[0].mxu0
  %184 = vdwg.mxu0
  %v185 = vmax.f32 %v179, 0.0
  %v186 = vmax.f32 %v182, 0.0
  %v187 = vpack.c.bf16 %v186, %v185
  %v188 = vld [vmem:[%s5] sm:$0xf]
  %v189 = vld [vmem:[%s5 + $0x4] sm:$0xf]
  %v190 = vld [vmem:[%s5 + $0x8] sm:$0xf]
  %v191 = vld [vmem:[%s5 + $0xc] sm:$0xf]
  %v192 = vld [vmem:[%s6] sm:$0x1]
  %v194 = vlaneseq
  %v195 = vshrl.u32 %v194, 7
  %v196 = vsub.s32 0, %v195
  %v197 = vrot.slane %v192, %v196
  %v203 = vunpack.c.l.b16 %v188
  %v204 = vunpack.c.l.b16 %v189
  %v205 = vunpack.c.l.b16 %v190
  %v206 = vunpack.c.l.b16 %v191
  %v207 = vpack.c.b16 %v204, %v203
  %v208 = vpack.c.b16 %v206, %v205
  %v212 = vsel %vm53, %v187, 0
  %214 = vmatprep.subr.bf16.mxu0 0
  %215 = vmatpush1.bf16.msra.mxu0 %v207
  %216 = vmatprep.subr.bf16.mxu0 0
  %217 = vmatpush1.bf16.msra.mxu0 %v208
  %218 = vmatprep.subr.bf16.mxu0 0
  %219 = vmatpush1.bf16.msra.mxu0 0
  %220 = vmatprep.subr.bf16.mxu0 0
  %221 = vmatpush1.bf16.msra.mxu0 0
  %222 = vmatprep.subr.bf16.mxu0 0
  %223 = vmatpush1.bf16.msra.mxu0 0
  %224 = vmatprep.subr.bf16.mxu0 0
  %225 = vmatpush1.bf16.msra.mxu0 0
  %226 = vmatprep.subr.bf16.mxu0 0
  %227 = vmatpush1.bf16.msra.mxu0 0
  %228 = vmatprep.subr.bf16.mxu0 0
  %229 = vmatpush1.bf16.msra.mxu0 0
  %230 = vmatprep.subr.bf16.mxu0 0
  %231 = vmatpush1.bf16.msra.mxu0 0
  %232 = vmatprep.subr.bf16.mxu0 0
  %233 = vmatpush1.bf16.msra.mxu0 0
  %234 = vmatprep.subr.bf16.mxu0 0
  %235 = vmatpush1.bf16.msra.mxu0 0
  %236 = vmatprep.subr.bf16.mxu0 0
  %237 = vmatpush1.bf16.msra.mxu0 0
  %238 = vmatprep.subr.bf16.mxu0 0
  %239 = vmatpush1.bf16.msra.mxu0 0
  %240 = vmatprep.subr.bf16.mxu0 0
  %241 = vmatpush1.bf16.msra.mxu0 0
  %242 = vmatprep.subr.bf16.mxu0 0
  %243 = vmatpush1.bf16.msra.mxu0 0
  %244 = vmatprep.subr.bf16.mxu0 0
  %245 = vmatpush1.bf16.msra.mxu0 0
  %246 = vmatprep.mubr.bf16.mxu0 0
  %247 = vmatmul.mubr.bf16.gmra.mrb[0].mxu0 %v212
  %v248 = vpop.f32.mrb[0].mxu0
  %v249 = vadd.f32 %v197, %v248
  %v250 = vpop.f32.mrb[0].mxu0
  %v251 = vpop.f32.mrb[0].mxu0
  %v252 = vadd.f32 %v197, %v251
  %v253 = vpop.f32.mrb[0].mxu0
  %254 = vdwg.mxu0
  %v255 = vpack.c.bf16 %v252, %v249
  %v257 = vunpack.c.l.b16 %v255
  %v258 = vunpack.c.h.b16 %v255
  %v259 = vpack.c.b16 %v257, %v257
  %v260 = vpack.c.b16 %v258, %v258
  %vm263 = vcmask 76800
  %264 = vst.msk [vmem:[%s7] sm:$0xf] %vm263, %v259
  %265 = vst.msk [vmem:[%s7 + $0x4] sm:$0xf] %vm263, %v260
  // Predicated region
  $region30: #{net_forward.1} parent=0 // pred_check
    _
  $region31: #{net_forward.1} parent=0 // pred_check_branch
    %267 = sbr.rel (0) target = $region33
  $region32: #{net_forward.1} parent=0 // pred_region
    _
  $region33: #{net_forward.1} parent=0 // pred_fallthru
    _
  // Predicated region
  $region34: #{net_forward.1} parent=0 // pred_check
    _
  $region35: #{net_forward.1} parent=0 // pred_check_branch
    %269 = sbr.rel (0) target = $region37
  $region36: #{net_forward.1} parent=0 // pred_region
    _
  $region37: #{net_forward.1} parent=0 // pred_fallthru
    _

</llo_original>
